<compile_context>
chip_gen: v6e
topology: v6e:2x2x1
jax: 0.10.0
libtpu: 0.0.40
codegen_flags: <defaults>
</compile_context>

<pallas_src>
import math

import jax
import jax.numpy as jnp
from jax.experimental import pallas as pl
from jax.experimental.pallas import tpu as pltpu


def _make_value_mlp_kernel(epilogue_dtype):
    """Feature-major fused MLP kernel; epilogue (bias+ReLU) dtype is closed over."""

    def kernel(xt_ref, w1_ref, b1_ref, w2_ref, b2_ref, w3_ref, b3_ref, o_ref):
        # xt:  (IN, TM)  bf16   (batch on the 128-lane axis)
        # w1:  (H1, IN)  bf16   (PyTorch (out, in) layout, used directly)
        # b1:  (H1, 1)   epilogue_dtype
        # w2:  (H2, H1)  bf16
        # b2:  (H2, 1)   epilogue_dtype
        # w3:  (1,  H2)  bf16
        # b3:  (1,  1)   f32
        # o:   (1,  TM)  f32    (lane-dense value head)

        # Layer 1: (H1, IN) x (IN, TM) -> (H1, TM), f32 accumulation on MXU.
        h = jnp.dot(w1_ref[...], xt_ref[...],
                    preferred_element_type=jnp.float32)
        h = jnp.maximum(h.astype(epilogue_dtype) + b1_ref[...], 0.0)

        # Layer 2: (H2, H1) x (H1, TM) -> (H2, TM).
        h = jnp.dot(w2_ref[...], h.astype(w2_ref.dtype),
                    preferred_element_type=jnp.float32)
        h = jnp.maximum(h.astype(epilogue_dtype) + b2_ref[...], 0.0)

        # Value head: (1, H2) x (H2, TM) -> (1, TM); tiny, keep f32 epilogue.
        o = jnp.dot(w3_ref[...], h.astype(w3_ref.dtype),
                    preferred_element_type=jnp.float32)
        o_ref[...] = (o + b3_ref[...]).astype(o_ref.dtype)

    return kernel


def _default_epilogue_dtype():
    """bf16 epilogue on chips with a bf16 VPU (v6e/v7x); f32 elsewhere (v5e...)."""
    try:
        kind = jax.devices()[0].device_kind.lower()
    except Exception:  # pragma: no cover - defensive
        return jnp.float32
    if "v6" in kind or "v7" in kind:
        return jnp.bfloat16
    return jnp.float32  # v5e/v5p/v4/unknown: no bf16 VALU -> keep f32 epilogue


def _choose_tiling(batch, tm):
    """Pick (tile_m, padded_batch, grid) with:
       * tile_m a multiple of 128 (lane-dense blocks, (8,128) rule),
       * >= 2 grid steps whenever possible (v7x megacore split),
       * near-even split so padding waste is < 128 extra batch columns."""
    n_cols = pl.cdiv(batch, 128)            # 128-lane batch columns needed
    cols_cap = max(1, tm // 128)            # per-tile cap, forced to 128-multiple
    steps = pl.cdiv(n_cols, cols_cap)
    if n_cols >= 2:
        steps = max(steps, 2)               # keep both v7x TensorCores busy
    cols_per_tile = pl.cdiv(n_cols, steps)  # near-even split
    tile_m = cols_per_tile * 128
    grid_m = pl.cdiv(n_cols, cols_per_tile)
    padded = grid_m * tile_m
    return tile_m, padded, grid_m


def value_net_forward(x, params, *, tm=8192, epilogue_dtype=None):
    """x: (batch, input_size) f32.  Returns (batch,) f32 (squeeze(-1) applied)."""
    w1, b1, w2, b2, w3, b3 = params
    batch, in_size = x.shape
    h1, h2 = w1.shape[0], w2.shape[0]

    if epilogue_dtype is None:
        epilogue_dtype = _default_epilogue_dtype()

    tile_m, padded, grid_m = _choose_tiling(batch, tm)

    # Feature-major input.  Cast to bf16 BEFORE the transpose and pad in bf16
    # so the single wrapper-side layout pass moves half the bytes and XLA can
    # fuse convert+transpose+pad.
    xt = x.astype(jnp.bfloat16).T
    if padded != batch:
        xt = jnp.pad(xt, ((0, 0), (0, padded - batch)))

    # bf16 MXU operands; biases in the epilogue dtype (f32 on v5e, bf16 on
    # v6e/v7x); the value-head bias stays f32.
    w1b = w1.astype(jnp.bfloat16)
    w2b = w2.astype(jnp.bfloat16)
    w3b = w3.astype(jnp.bfloat16)
    b1c = b1.reshape(h1, 1).astype(epilogue_dtype)
    b2c = b2.reshape(h2, 1).astype(epilogue_dtype)
    b3c = b3.reshape(1, 1).astype(jnp.float32)

    const = lambda shape: pl.BlockSpec(shape, lambda i: (0, 0))  # VMEM-resident

    flops = 2 * padded * (in_size * h1 + h1 * h2 + h2 * 1)
    bytes_accessed = (
        padded * in_size * 2                       # x^T tiles (bf16)
        + (h1 * in_size + h2 * h1 + h2) * 2        # weights (bf16)
        + (h1 + h2) * jnp.dtype(epilogue_dtype).itemsize + 4   # biases
        + padded * 4                               # output (f32)
    )

    out = pl.pallas_call(
        _make_value_mlp_kernel(epilogue_dtype),
        out_shape=jax.ShapeDtypeStruct((1, padded), jnp.float32),
        grid_spec=pltpu.PrefetchScalarGridSpec(
            num_scalar_prefetch=0,
            grid=(grid_m,),
            in_specs=[
                pl.BlockSpec((in_size, tile_m), lambda i: (0, i)),  # x^T tile
                const((h1, in_size)),   # W1
                const((h1, 1)),         # b1
                const((h2, h1)),        # W2
                const((h2, 1)),         # b2
                const((1, h2)),         # W3
                const((1, 1)),          # b3
            ],
            out_specs=pl.BlockSpec((1, tile_m), lambda i: (0, i)),
        ),
        compiler_params=pltpu.CompilerParams(
            dimension_semantics=("parallel",),      # megacore split on v7x
        ),
        cost_estimate=pl.CostEstimate(
            flops=flops, transcendentals=0, bytes_accessed=bytes_accessed),
    )(xt, w1b, b1c, w2b, b2c, w3b, b3c)

    return out[0, :batch]


def _xavier_uniform(key, out_features, in_features, dtype=jnp.float32):
    """torch.nn.init.xavier_uniform_ on a PyTorch (out, in) weight (gain=1)."""
    bound = math.sqrt(6.0 / (in_features + out_features))
    return jax.random.uniform(key, (out_features, in_features), dtype=dtype,
                              minval=-bound, maxval=bound)


def init_value_net_params(key, input_size=20, hidden_layers=(128, 128)):
    # ValueNetwork forces output_size=1; biases are zero-initialized.
    sizes = [input_size, *hidden_layers, 1]
    keys = jax.random.split(key, len(sizes) - 1)
    params = []
    for k, fan_in, fan_out in zip(keys, sizes[:-1], sizes[1:]):
        params.append(_xavier_uniform(k, fan_out, fan_in))
        params.append(jnp.zeros((fan_out,), dtype=jnp.float32))
    return tuple(params)


if __name__ == "__main__":
    # NetworkConfig defaults: input_size=20, hidden_layers=[128, 128],
    # activation='relu', dropout=0.0, batch_norm=False; ValueNetwork sets
    # output_size=1 and squeezes the last dim.
    key = jax.random.PRNGKey(0)
    k_param, k_x = jax.random.split(key)
    params = init_value_net_params(k_param, input_size=20,
                                   hidden_layers=(128, 128))

    batch = 300  # non-multiple of 128 -> exercises padding and a 2-step grid
    x = jax.random.normal(k_x, (batch, 20), dtype=jnp.float32)

    out = jax.block_until_ready(value_net_forward(x, params))

    # Pure-JAX f32 reference of the same forward pass (PyTorch semantics).
    w1, b1, w2, b2, w3, b3 = params
    ref = jnp.maximum(x @ w1.T + b1, 0.0)
    ref = jnp.maximum(ref @ w2.T + b2, 0.0)
    ref = (ref @ w3.T + b3).squeeze(-1)

    assert out.shape == (batch,), out.shape
    max_err = float(jnp.max(jnp.abs(out - ref)))
    # bf16 MXU operands (and a bf16 epilogue on v6e/v7x) with f32 accumulation
    # -> relaxed tolerance vs the f32 reference.
    assert jnp.allclose(out, ref, atol=5e-2, rtol=5e-2), max_err

    print("KERNEL_OK")
</pallas_src>

<mosaic_0001>
module attributes {stable_mosaic.version = 11 : i64} {
  func.func @kernel(%arg0: i32, %arg1: memref<20x256xbf16, #tpu.memory_space<vmem>>, %arg2: memref<128x20xbf16, #tpu.memory_space<vmem>>, %arg3: memref<128x1xf32, #tpu.memory_space<vmem>>, %arg4: memref<128x128xbf16, #tpu.memory_space<vmem>>, %arg5: memref<128x1xf32, #tpu.memory_space<vmem>>, %arg6: memref<1x128xbf16, #tpu.memory_space<vmem>>, %arg7: memref<1x1xf32, #tpu.memory_space<vmem>>, %arg8: memref<1x256xf32, #tpu.memory_space<vmem>>) attributes {dimension_semantics = [#tpu.dimension_semantics<parallel>], iteration_bounds = array<i64: 2>, scalar_prefetch = 0 : i64, scratch_operands = 0 : i64, tpu.core_type = #tpu.core_type<tc>, window_params = [{transform_indices = @transform_0, window_bounds = array<i64: 20, 256>}, {pipeline_mode = #tpu.pipeline_mode<synchronous>, transform_indices = @transform_1, window_bounds = array<i64: 128, 20>}, {pipeline_mode = #tpu.pipeline_mode<synchronous>, transform_indices = @transform_2, window_bounds = array<i64: 128, 1>}, {pipeline_mode = #tpu.pipeline_mode<synchronous>, transform_indices = @transform_3, window_bounds = array<i64: 128, 128>}, {pipeline_mode = #tpu.pipeline_mode<synchronous>, transform_indices = @transform_4, window_bounds = array<i64: 128, 1>}, {pipeline_mode = #tpu.pipeline_mode<synchronous>, transform_indices = @transform_5, window_bounds = array<i64: 1, 128>}, {pipeline_mode = #tpu.pipeline_mode<synchronous>, transform_indices = @transform_6, window_bounds = array<i64: 1, 1>}, {transform_indices = @transform_7, window_bounds = array<i64: 1, 256>}]} {
    %c0 = arith.constant 0 : index
    %c0_0 = arith.constant 0 : index
    %0 = vector.load %arg2[%c0, %c0_0] : memref<128x20xbf16, #tpu.memory_space<vmem>>, vector<128x20xbf16>
    %c0_1 = arith.constant 0 : index
    %c0_2 = arith.constant 0 : index
    %1 = vector.load %arg1[%c0_1, %c0_2] : memref<20x256xbf16, #tpu.memory_space<vmem>>, vector<20x256xbf16>
    %cst = arith.constant dense<0.000000e+00> : vector<128x256xf32>
    %2 = tpu.matmul %0, %1, %cst {dimension_numbers = #tpu.dot_dimension_numbers<[1], [0], [0], [1], [0, 0, 1, 1], [], []>} : vector<128x20xbf16>, vector<20x256xbf16>, vector<128x256xf32> -> vector<128x256xf32>
    %c0_3 = arith.constant 0 : index
    %c0_4 = arith.constant 0 : index
    %3 = vector.load %arg3[%c0_3, %c0_4] : memref<128x1xf32, #tpu.memory_space<vmem>>, vector<128x1xf32>
    %4 = vector.broadcast %3 : vector<128x1xf32> to vector<128x256xf32>
    %5 = arith.addf %2, %4 : vector<128x256xf32>
    %cst_5 = arith.constant 0.000000e+00 : f32
    %6 = vector.broadcast %cst_5 : f32 to vector<128x256xf32>
    %7 = arith.maximumf %5, %6 : vector<128x256xf32>
    %c0_6 = arith.constant 0 : index
    %c0_7 = arith.constant 0 : index
    %8 = vector.load %arg4[%c0_6, %c0_7] : memref<128x128xbf16, #tpu.memory_space<vmem>>, vector<128x128xbf16>
    %9 = arith.truncf %7 : vector<128x256xf32> to vector<128x256xbf16>
    %cst_8 = arith.constant dense<0.000000e+00> : vector<128x256xf32>
    %10 = tpu.matmul %8, %9, %cst_8 {dimension_numbers = #tpu.dot_dimension_numbers<[1], [0], [0], [1], [0, 0, 1, 1], [], []>} : vector<128x128xbf16>, vector<128x256xbf16>, vector<128x256xf32> -> vector<128x256xf32>
    %c0_9 = arith.constant 0 : index
    %c0_10 = arith.constant 0 : index
    %11 = vector.load %arg5[%c0_9, %c0_10] : memref<128x1xf32, #tpu.memory_space<vmem>>, vector<128x1xf32>
    %12 = vector.broadcast %11 : vector<128x1xf32> to vector<128x256xf32>
    %13 = arith.addf %10, %12 : vector<128x256xf32>
    %cst_11 = arith.constant 0.000000e+00 : f32
    %14 = vector.broadcast %cst_11 : f32 to vector<128x256xf32>
    %15 = arith.maximumf %13, %14 : vector<128x256xf32>
    %c0_12 = arith.constant 0 : index
    %c0_13 = arith.constant 0 : index
    %16 = vector.load %arg6[%c0_12, %c0_13] : memref<1x128xbf16, #tpu.memory_space<vmem>>, vector<1x128xbf16>
    %17 = arith.truncf %15 : vector<128x256xf32> to vector<128x256xbf16>
    %cst_14 = arith.constant dense<0.000000e+00> : vector<1x256xf32>
    %18 = tpu.matmul %16, %17, %cst_14 {dimension_numbers = #tpu.dot_dimension_numbers<[1], [0], [0], [1], [0, 0, 1, 1], [], []>} : vector<1x128xbf16>, vector<128x256xbf16>, vector<1x256xf32> -> vector<1x256xf32>
    %c0_15 = arith.constant 0 : index
    %c0_16 = arith.constant 0 : index
    %19 = vector.load %arg7[%c0_15, %c0_16] : memref<1x1xf32, #tpu.memory_space<vmem>>, vector<1x1xf32>
    %20 = vector.broadcast %19 : vector<1x1xf32> to vector<1x256xf32>
    %21 = arith.addf %18, %20 : vector<1x256xf32>
    %c0_17 = arith.constant 0 : index
    %c0_18 = arith.constant 0 : index
    %22 = vector.load %arg8[%c0_17, %c0_18] : memref<1x256xf32, #tpu.memory_space<vmem>>, vector<1x256xf32>
    tpu.vector_store %arg8[%c0_17, %c0_18], %21 {strides = array<i32>} : memref<1x256xf32, #tpu.memory_space<vmem>>, vector<1x256xf32>,
    return
  }
  func.func @transform_0(%arg0: i32) -> (i32, i32) {
    %c0_i32 = arith.constant 0 : i32
    %c0_i32_0 = arith.constant 0 : i32
    return %c0_i32, %arg0 : i32, i32
  }
  func.func @transform_1(%arg0: i32) -> (i32, i32) {
    %c0_i32 = arith.constant 0 : i32
    %c0_i32_0 = arith.constant 0 : i32
    %c0_i32_1 = arith.constant 0 : i32
    return %c0_i32, %c0_i32_0 : i32, i32
  }
  func.func @transform_2(%arg0: i32) -> (i32, i32) {
    %c0_i32 = arith.constant 0 : i32
    %c0_i32_0 = arith.constant 0 : i32
    %c0_i32_1 = arith.constant 0 : i32
    return %c0_i32, %c0_i32_0 : i32, i32
  }
  func.func @transform_3(%arg0: i32) -> (i32, i32) {
    %c0_i32 = arith.constant 0 : i32
    %c0_i32_0 = arith.constant 0 : i32
    %c0_i32_1 = arith.constant 0 : i32
    return %c0_i32, %c0_i32_0 : i32, i32
  }
  func.func @transform_4(%arg0: i32) -> (i32, i32) {
    %c0_i32 = arith.constant 0 : i32
    %c0_i32_0 = arith.constant 0 : i32
    %c0_i32_1 = arith.constant 0 : i32
    return %c0_i32, %c0_i32_0 : i32, i32
  }
  func.func @transform_5(%arg0: i32) -> (i32, i32) {
    %c0_i32 = arith.constant 0 : i32
    %c0_i32_0 = arith.constant 0 : i32
    %c0_i32_1 = arith.constant 0 : i32
    return %c0_i32, %c0_i32_0 : i32, i32
  }
  func.func @transform_6(%arg0: i32) -> (i32, i32) {
    %c0_i32 = arith.constant 0 : i32
    %c0_i32_0 = arith.constant 0 : i32
    %c0_i32_1 = arith.constant 0 : i32
    return %c0_i32, %c0_i32_0 : i32, i32
  }
  func.func @transform_7(%arg0: i32) -> (i32, i32) {
    %c0_i32 = arith.constant 0 : i32
    %c0_i32_0 = arith.constant 0 : i32
    return %c0_i32, %arg0 : i32, i32
  }
}

</mosaic_0001>

<llo_original>
// kernel: tpu_custom_call.1
$region0: #{tpu_custom_call.1}
  #allocation0 [shape = 'u32[]', space=smem, size = 0x4, offset = 0x4, fixed_abs, tag = 'smem constant byte address 0x4 - core index']
  #allocation1 [shape = 'u32[144,128]{1,0:T(1,128)}', space=vmem, size = 0x12000, scoped, tag = 'internal scratch']
  #allocation2 [shape = 'f32[1,1]{1,0:T(1,128)S(1)}', space=vmem, size = 0x200, scoped, tag = 'scoped memory for tpu_custom_call.1']
  %s0 = inlined_call_operand.vmem [shape: bf16[20,512], index: 0, kind: input, shape index: {}]
  %s1 = inlined_call_operand.vmem [shape: bf16[128,20], index: 1, kind: input, shape index: {}]
  %s2 = inlined_call_operand.vmem [shape: f32[128,1], index: 2, kind: input, shape index: {}]
  %s3 = inlined_call_operand.vmem [shape: bf16[128,128], index: 3, kind: input, shape index: {}]
  %s4 = inlined_call_operand.vmem [shape: f32[128,1], index: 4, kind: input, shape index: {}]
  %s5 = inlined_call_operand.vmem [shape: bf16[1,128], index: 5, kind: input, shape index: {}]
  %s6 = inlined_call_operand.<no memory space> [shape: f32[1,1], index: 6, kind: input, shape index: {}]
  %s7 = inlined_call_operand.hbm [shape: f32[1,512], index: 7, kind: output, shape index: {}]
  %s8 = sld [smem:[#allocation0]]
  $region99: #{tpu_custom_call.1} parent=0
    _
  %s10 = ssub.s32 1, %s8
  %s11 = scalar_select 0, %s10, %s8
  %v12 = vstv %s6
  %13 = vst [vmem:[#allocation2] sm:$0x1] %v12
  $region1: #{tpu_custom_call.1} parent=0
    #allocation3 [shape = 'u8[24576]{0}', space=vmem, size = 0x6000, scoped, tag = 'input window, operand 0']
    #allocation4 [shape = 'u8[2048]{0}', space=vmem, size = 0x800, scoped, tag = 'output window, operand 0']
    #allocation5 [shape = 's32[2]{0}', space=sflag, size = 0x8, scoped, tag = 'scoped memory for tpu_custom_call.1']
    %14 = vsyncpa [#allocation5], 0
    %s15 = scalar_lea.sflag [#allocation5], 1
    %16 = vsyncpa %s15, 0
    loop: start=0, step=1, limit=4
    $region2: #{tpu_custom_call.1} parent=1 // loop_pre_header
      _
    $region3: #{tpu_custom_call.1} parent=1 // loop_header
      %s18 = sphi 0, %s22
      %p19 = scmp.ge.s32.totalorder %s18, 4
      %s28 = sphi 0, %s30
      %s31 = sphi 0, %s28
      %s32 = sphi 0, %s31
      %s48 = sphi 0, %s32
      %s52 = sphi 0, %s52
      %s54 = sphi 0, %s52
      %s55 = sphi 0, %s54
      %s69 = sphi 0, %s55
      %s73 = sphi 0, %s73
      %s75 = sphi 0, %s73
      %s76 = sphi 0, %s75
      %s90 = sphi 0, %s76
      %s94 = sphi 0, %s94
      %s96 = sphi 0, %s94
      %s97 = sphi 0, %s96
      %s111 = sphi 0, %s97
      %s115 = sphi 0, %s115
      %s117 = sphi 0, %s115
      %s118 = sphi 0, %s117
      %s132 = sphi 0, %s118
      %s136 = sphi 0, %s136
      %s138 = sphi 0, %s136
      %s139 = sphi 0, %s138
      %s153 = sphi 0, %s139
      %s157 = sphi 0, %s157
      %s159 = sphi 0, %s157
      %s160 = sphi 0, %s159
      %s174 = sphi 0, %s160
      %s180 = sphi 0, %s182
      %s183 = sphi 0, %s180
      %s184 = sphi 0, %s183
      %s200 = sphi 0, %s184
    $region4: #{tpu_custom_call.1} parent=1 // loop_header_branch
      %21 = sbr.rel (%p19) target = $region8
    $region5: #{tpu_custom_call.1} parent=1 // loop_body
      %s23 = ssub.s32 %s18, 1
      %s24 = ssub.s32 %s18, 2
      %s25 = sadd.s32 %s18, 1
      %s26 = ssub.s32 %s18, %s25
      %p27 = scmp.eq.s32.totalorder %s26, 0
      %s29 = sadd.s32 %s28, 1
      %s30 = scalar_select %p27, %s28, %s29
      %p33 = pneg %p27
      %p34 = scmp.eq.s32.totalorder %s18, 1
      %p35 = por %p33, %p34
      %p36 = scmp.ne.s32.totalorder %s28, %s31
      %p37 = scmp.eq.s32.totalorder %s18, 0
      %p38 = por %p36, %p37
      %p39 = scmp.ne.s32.totalorder %s28, %s31
      %p40 = scmp.eq.s32.totalorder %s23, 1
      %p41 = por %p39, %p40
      %p42 = scmp.ne.s32.totalorder %s31, %s32
      %p43 = scmp.eq.s32.totalorder %s23, 0
      %p44 = por %p42, %p43
      %p45 = scmp.ne.s32.totalorder %s31, %s32
      %p46 = scmp.eq.s32.totalorder %s24, 1
      %p47 = por %p45, %p46
      %p49 = scmp.ne.s32.totalorder %s32, %s48
      %p50 = scmp.eq.s32.totalorder %s24, 0
      %p51 = por %p49, %p50
      %s53 = sadd.s32 %s52, 1
      %p56 = scmp.eq.s32.totalorder %s18, 1
      %p57 = scmp.ne.s32.totalorder %s52, %s54
      %p58 = scmp.eq.s32.totalorder %s18, 0
      %p59 = por %p57, %p58
      %p60 = scmp.ne.s32.totalorder %s52, %s54
      %p61 = scmp.eq.s32.totalorder %s23, 1
      %p62 = por %p60, %p61
      %p63 = scmp.ne.s32.totalorder %s54, %s55
      %p64 = scmp.eq.s32.totalorder %s23, 0
      %p65 = por %p63, %p64
      %p66 = scmp.ne.s32.totalorder %s54, %s55
      %p67 = scmp.eq.s32.totalorder %s24, 1
      %p68 = por %p66, %p67
      %p70 = scmp.ne.s32.totalorder %s55, %s69
      %p71 = scmp.eq.s32.totalorder %s24, 0
      %p72 = por %p70, %p71
      %s74 = sadd.s32 %s73, 1
      %p77 = scmp.eq.s32.totalorder %s18, 1
      %p78 = scmp.ne.s32.totalorder %s73, %s75
      %p79 = scmp.eq.s32.totalorder %s18, 0
      %p80 = por %p78, %p79
      %p81 = scmp.ne.s32.totalorder %s73, %s75
      %p82 = scmp.eq.s32.totalorder %s23, 1
      %p83 = por %p81, %p82
      %p84 = scmp.ne.s32.totalorder %s75, %s76
      %p85 = scmp.eq.s32.totalorder %s23, 0
      %p86 = por %p84, %p85
      %p87 = scmp.ne.s32.totalorder %s75, %s76
      %p88 = scmp.eq.s32.totalorder %s24, 1
      %p89 = por %p87, %p88
      %p91 = scmp.ne.s32.totalorder %s76, %s90
      %p92 = scmp.eq.s32.totalorder %s24, 0
      %p93 = por %p91, %p92
      %s95 = sadd.s32 %s94, 1
      %p98 = scmp.eq.s32.totalorder %s18, 1
      %p99 = scmp.ne.s32.totalorder %s94, %s96
      %p100 = scmp.eq.s32.totalorder %s18, 0
      %p101 = por %p99, %p100
      %p102 = scmp.ne.s32.totalorder %s94, %s96
      %p103 = scmp.eq.s32.totalorder %s23, 1
      %p104 = por %p102, %p103
      %p105 = scmp.ne.s32.totalorder %s96, %s97
      %p106 = scmp.eq.s32.totalorder %s23, 0
      %p107 = por %p105, %p106
      %p108 = scmp.ne.s32.totalorder %s96, %s97
      %p109 = scmp.eq.s32.totalorder %s24, 1
      %p110 = por %p108, %p109
      %p112 = scmp.ne.s32.totalorder %s97, %s111
      %p113 = scmp.eq.s32.totalorder %s24, 0
      %p114 = por %p112, %p113
      %s116 = sadd.s32 %s115, 1
      %p119 = scmp.eq.s32.totalorder %s18, 1
      %p120 = scmp.ne.s32.totalorder %s115, %s117
      %p121 = scmp.eq.s32.totalorder %s18, 0
      %p122 = por %p120, %p121
      %p123 = scmp.ne.s32.totalorder %s115, %s117
      %p124 = scmp.eq.s32.totalorder %s23, 1
      %p125 = por %p123, %p124
      %p126 = scmp.ne.s32.totalorder %s117, %s118
      %p127 = scmp.eq.s32.totalorder %s23, 0
      %p128 = por %p126, %p127
      %p129 = scmp.ne.s32.totalorder %s117, %s118
      %p130 = scmp.eq.s32.totalorder %s24, 1
      %p131 = por %p129, %p130
      %p133 = scmp.ne.s32.totalorder %s118, %s132
      %p134 = scmp.eq.s32.totalorder %s24, 0
      %p135 = por %p133, %p134
      %s137 = sadd.s32 %s136, 1
      %p140 = scmp.eq.s32.totalorder %s18, 1
      %p141 = scmp.ne.s32.totalorder %s136, %s138
      %p142 = scmp.eq.s32.totalorder %s18, 0
      %p143 = por %p141, %p142
      %p144 = scmp.ne.s32.totalorder %s136, %s138
      %p145 = scmp.eq.s32.totalorder %s23, 1
      %p146 = por %p144, %p145
      %p147 = scmp.ne.s32.totalorder %s138, %s139
      %p148 = scmp.eq.s32.totalorder %s23, 0
      %p149 = por %p147, %p148
      %p150 = scmp.ne.s32.totalorder %s138, %s139
      %p151 = scmp.eq.s32.totalorder %s24, 1
      %p152 = por %p150, %p151
      %p154 = scmp.ne.s32.totalorder %s139, %s153
      %p155 = scmp.eq.s32.totalorder %s24, 0
      %p156 = por %p154, %p155
      %s158 = sadd.s32 %s157, 1
      %p161 = scmp.eq.s32.totalorder %s18, 1
      %p162 = scmp.ne.s32.totalorder %s157, %s159
      %p163 = scmp.eq.s32.totalorder %s18, 0
      %p164 = por %p162, %p163
      %p165 = scmp.ne.s32.totalorder %s157, %s159
      %p166 = scmp.eq.s32.totalorder %s23, 1
      %p167 = por %p165, %p166
      %p168 = scmp.ne.s32.totalorder %s159, %s160
      %p169 = scmp.eq.s32.totalorder %s23, 0
      %p170 = por %p168, %p169
      %p171 = scmp.ne.s32.totalorder %s159, %s160
      %p172 = scmp.eq.s32.totalorder %s24, 1
      %p173 = por %p171, %p172
      %p175 = scmp.ne.s32.totalorder %s160, %s174
      %p176 = scmp.eq.s32.totalorder %s24, 0
      %p177 = por %p175, %p176
      %s178 = ssub.s32 %s18, %s25
      %p179 = scmp.eq.s32.totalorder %s178, 0
      %s181 = sadd.s32 %s180, 1
      %s182 = scalar_select %p179, %s180, %s181
      %p185 = pneg %p179
      %p186 = scmp.eq.s32.totalorder %s18, 1
      %p187 = por %p185, %p186
      %p188 = scmp.ne.s32.totalorder %s180, %s183
      %p189 = scmp.eq.s32.totalorder %s18, 0
      %p190 = por %p188, %p189
      %p191 = scmp.ne.s32.totalorder %s180, %s183
      %p192 = scmp.eq.s32.totalorder %s23, 1
      %p193 = por %p191, %p192
      %p194 = scmp.ne.s32.totalorder %s183, %s184
      %p195 = scmp.eq.s32.totalorder %s23, 0
      %p196 = por %p194, %p195
      %p197 = scmp.ne.s32.totalorder %s183, %s184
      %p198 = scmp.eq.s32.totalorder %s24, 1
      %p199 = por %p197, %p198
      %p201 = scmp.ne.s32.totalorder %s184, %s200
      %p202 = scmp.eq.s32.totalorder %s24, 0
      %p203 = por %p201, %p202
      %p204 = scmp.le.s32.totalorder 1, %s18
      %p205 = scmp.lt.s32.totalorder %s18, 3
      %p206 = pnand %p204, %p205
      %p207 = pneg %p206
      // Predicated region
      $region9: #{tpu_custom_call.1} parent=5 // pred_check
        _
      $region10: #{tpu_custom_call.1} parent=5 // pred_check_branch
        %209 = sbr.rel (%p206) target = $region12
      $region11: #{tpu_custom_call.1} parent=5 // pred_region
        %s210 = ssub.s32 %s18, 1
        // Predicated region
        $region13: #{tpu_custom_call.1} parent=11 // pred_check
          %p211 = pneg %p65
        $region14: #{tpu_custom_call.1} parent=11 // pred_check_branch
          %213 = sbr.rel (%p211) target = $region16
        $region15: #{tpu_custom_call.1} parent=11 // pred_region
          _
        $region16: #{tpu_custom_call.1} parent=11 // pred_fallthru
          _
        // Predicated region
        $region17: #{tpu_custom_call.1} parent=11 // pred_check
          %p214 = pneg %p86
        $region18: #{tpu_custom_call.1} parent=11 // pred_check_branch
          %216 = sbr.rel (%p214) target = $region20
        $region19: #{tpu_custom_call.1} parent=11 // pred_region
          _
        $region20: #{tpu_custom_call.1} parent=11 // pred_fallthru
          _
        // Predicated region
        $region21: #{tpu_custom_call.1} parent=11 // pred_check
          %p217 = pneg %p107
        $region22: #{tpu_custom_call.1} parent=11 // pred_check_branch
          %219 = sbr.rel (%p217) target = $region24
        $region23: #{tpu_custom_call.1} parent=11 // pred_region
          _
        $region24: #{tpu_custom_call.1} parent=11 // pred_fallthru
          _
        // Predicated region
        $region25: #{tpu_custom_call.1} parent=11 // pred_check
          %p220 = pneg %p128
        $region26: #{tpu_custom_call.1} parent=11 // pred_check_branch
          %222 = sbr.rel (%p220) target = $region28
        $region27: #{tpu_custom_call.1} parent=11 // pred_region
          _
        $region28: #{tpu_custom_call.1} parent=11 // pred_fallthru
          _
        // Predicated region
        $region29: #{tpu_custom_call.1} parent=11 // pred_check
          %p223 = pneg %p149
        $region30: #{tpu_custom_call.1} parent=11 // pred_check_branch
          %225 = sbr.rel (%p223) target = $region32
        $region31: #{tpu_custom_call.1} parent=11 // pred_region
          _
        $region32: #{tpu_custom_call.1} parent=11 // pred_fallthru
          _
        // Predicated region
        $region33: #{tpu_custom_call.1} parent=11 // pred_check
          %p226 = pneg %p170
        $region34: #{tpu_custom_call.1} parent=11 // pred_check_branch
          %228 = sbr.rel (%p226) target = $region36
        $region35: #{tpu_custom_call.1} parent=11 // pred_region
          _
        $region36: #{tpu_custom_call.1} parent=11 // pred_fallthru
          _
      $region12: #{tpu_custom_call.1} parent=5 // pred_fallthru
        _
      %p229 = scmp.lt.s32.totalorder %s18, 2
      // Predicated region
      $region37: #{tpu_custom_call.1} parent=5 // pred_check
        %p230 = pneg %p229
      $region38: #{tpu_custom_call.1} parent=5 // pred_check_branch
        %232 = sbr.rel (%p230) target = $region40
      $region39: #{tpu_custom_call.1} parent=5 // pred_region
        // Predicated region
        $region41: #{tpu_custom_call.1} parent=39 // pred_check
          %p233 = pneg %p38
        $region42: #{tpu_custom_call.1} parent=39 // pred_check_branch
          %235 = sbr.rel (%p233) target = $region44
        $region43: #{tpu_custom_call.1} parent=39 // pred_region
          %s236 = sand.u32 %s28, 1
          %s237 = sand.u32 %s28, 1
          %s238 = smul.addr %s237, 24
          %s239 = scalar_lea.vmem [#allocation3], %s238
          %s240 = smul.u32 2, %s18
          %s241 = smul.addr %s240, 4
          %s242 = scalar_lea.vmem %s0, %s241
          // Predicated region
          $region45: #{tpu_custom_call.1} parent=43 // pred_check
            _
          $region46: #{tpu_custom_call.1} parent=43 // pred_check_branch
            %244 = sbr.rel (0) target = $region48
          $region47: #{tpu_custom_call.1} parent=43 // pred_region
            // Predicated region
            $region49: #{tpu_custom_call.1} parent=47 // pred_check
              _
            $region50: #{tpu_custom_call.1} parent=47 // pred_check_branch
              %246 = sbr.rel (0) target = $region52
            $region51: #{tpu_custom_call.1} parent=47 // pred_region
              // Predicated region
              $region64: #{tpu_custom_call.1} parent=51 // pred_check
                _
              $region65: #{tpu_custom_call.1} parent=51 // pred_check_branch
                %266 = sbr.rel (0) target = $region67
              $region66: #{tpu_custom_call.1} parent=51 // pred_region
                loop: start=0, step=1, limit=1
                $region68: #{tpu_custom_call.1} parent=66 // loop_pre_header
                  _
                $region69: #{tpu_custom_call.1} parent=66 // loop_header
                  %s268 = sphi 0, %s272
                  %p269 = scmp.ge.s32.totalorder %s268, 1
                  %s273 = sphi %s242, %s242
                  %s274 = sphi %s239, %s239
                $region70: #{tpu_custom_call.1} parent=66 // loop_header_branch
                  %271 = sbr.rel (%p269) target = $region74
                $region71: #{tpu_custom_call.1} parent=66 // loop_body
                  %v275 = vld [vmem:[%s273] sm:$0xff]
                  %276 = vst [vmem:[%s274] sm:$0xff] %v275
                  %v277 = vld [vmem:[%s273 + $0x10] sm:$0xff]
                  %278 = vst [vmem:[%s274 + $0x8] sm:$0xff] %v277
                  %v279 = vld [vmem:[%s273 + $0x20] sm:$0xff]
                  %280 = vst [vmem:[%s274 + $0x10] sm:$0xff] %v279
                $region72: #{tpu_custom_call.1} parent=66 // loop_footer
                  %s272 = sadd.s32 1, %s268
                $region73: #{tpu_custom_call.1} parent=66 // loop_footer_branch
                  %267 = sbr.rel target = $region69
                $region74: #{tpu_custom_call.1} parent=66 // loop_exit
                  _
              $region67: #{tpu_custom_call.1} parent=51 // pred_fallthru
                _
              // Predicated region
              $region75: #{tpu_custom_call.1} parent=51 // pred_check
                _
              $region76: #{tpu_custom_call.1} parent=51 // pred_check_branch
                %282 = sbr.rel target = $region78
              $region77: #{tpu_custom_call.1} parent=51 // pred_region
                _
              $region78: #{tpu_custom_call.1} parent=51 // pred_fallthru
                _
            $region52: #{tpu_custom_call.1} parent=47 // pred_fallthru
              _
            // Predicated region
            $region53: #{tpu_custom_call.1} parent=47 // pred_check
              _
            $region54: #{tpu_custom_call.1} parent=47 // pred_check_branch
              %248 = sbr.rel target = $region56
            $region55: #{tpu_custom_call.1} parent=47 // pred_region
              %s250 = ssub.s32 256, 1
              loop: start=0, step=1, limit=1
              $region57: #{tpu_custom_call.1} parent=55 // loop_pre_header
                _
              $region58: #{tpu_custom_call.1} parent=55 // loop_header
                %s252 = sphi 0, %s256
                %p253 = scmp.ge.s32.totalorder %s252, 1
                %s257 = sphi %s242, %s242
                %s258 = sphi %s239, %s239
              $region59: #{tpu_custom_call.1} parent=55 // loop_header_branch
                %255 = sbr.rel (%p253) target = $region63
              $region60: #{tpu_custom_call.1} parent=55 // loop_body
                %v259 = vld [vmem:[%s257] sm:%s250]
                %260 = vst [vmem:[%s258] sm:%s250] %v259
                %v261 = vld [vmem:[%s257 + $0x10] sm:%s250]
                %262 = vst [vmem:[%s258 + $0x8] sm:%s250] %v261
                %v263 = vld [vmem:[%s257 + $0x20] sm:%s250]
                %264 = vst [vmem:[%s258 + $0x10] sm:%s250] %v263
              $region61: #{tpu_custom_call.1} parent=55 // loop_footer
                %s256 = sadd.s32 1, %s252
              $region62: #{tpu_custom_call.1} parent=55 // loop_footer_branch
                %251 = sbr.rel target = $region58
              $region63: #{tpu_custom_call.1} parent=55 // loop_exit
                _
            $region56: #{tpu_custom_call.1} parent=47 // pred_fallthru
              _
          $region48: #{tpu_custom_call.1} parent=43 // pred_fallthru
            _
          %283 = vnop
        $region44: #{tpu_custom_call.1} parent=39 // pred_fallthru
          _
      $region40: #{tpu_custom_call.1} parent=5 // pred_fallthru
        _
      %p284 = scmp.le.s32.totalorder 1, %s18
      %p285 = scmp.lt.s32.totalorder %s18, 3
      %p286 = pnand %p284, %p285
      %p287 = pneg %p286
      // Predicated region
      $region79: #{tpu_custom_call.1} parent=5 // pred_check
        _
      $region80: #{tpu_custom_call.1} parent=5 // pred_check_branch
        %289 = sbr.rel (%p286) target = $region82
      $region81: #{tpu_custom_call.1} parent=5 // pred_region
        %s290 = ssub.s32 %s18, 1
        %s291 = sand.u32 %s31, 1
        %s292 = sand.u32 %s31, 1
        %s293 = smul.addr %s292, 24
        %s294 = scalar_lea.vmem [#allocation3], %s293
        // Predicated region
        $region83: #{tpu_custom_call.1} parent=81 // pred_check
          %p295 = pneg %p44
        $region84: #{tpu_custom_call.1} parent=81 // pred_check_branch
          %297 = sbr.rel (%p295) target = $region86
        $region85: #{tpu_custom_call.1} parent=81 // pred_region
          _
        $region86: #{tpu_custom_call.1} parent=81 // pred_fallthru
          _
        %s298 = sand.u32 %s31, 1
        %s299 = sand.u32 %s31, 1
        %s300 = smul.addr %s299, 24
        %s301 = scalar_lea.vmem [#allocation3], %s300
        %p302 = pneg %p44
        %p303 = pneg %p41
        %p304 = pneg %p65
        %p305 = pneg %p62
        %p306 = pneg %p86
        %p307 = pneg %p83
        %p308 = pneg %p107
        %p309 = pneg %p104
        %p310 = pneg %p128
        %p311 = pneg %p125
        %p312 = pneg %p149
        %p313 = pneg %p146
        %p314 = pneg %p170
        %p315 = pneg %p167
        %p316 = pneg %p196
        %p317 = pneg %p193
        %s318 = sand.u32 %s183, 1
        %s319 = scalar_lea.sflag [#allocation5], %s318
        %s320 = sand.u32 %s183, 1
        %s321 = smul.addr %s320, 2
        %s322 = scalar_lea.vmem [#allocation4], %s321
        %s323 = smul.u32 2, %s23
        %s324 = smul.u32 2, %s23
        %v326 = vld [vmem:[%s1] sm:$0xf]
        %v327 = vld [vmem:[%s1 + $0x4] sm:$0xf]
        %v328 = vld [vmem:[%s1 + $0x8] sm:$0xf]
        %v329 = vld [vmem:[%s1 + $0xc] sm:$0xf]
        %v330 = vld [vmem:[%s1 + $0x10] sm:$0xf]
        %v331 = vld [vmem:[%s1 + $0x14] sm:$0xf]
        %v332 = vld [vmem:[%s1 + $0x18] sm:$0xf]
        %v333 = vld [vmem:[%s1 + $0x1c] sm:$0xf]
        %v334 = vld [vmem:[%s1 + $0x20] sm:$0xf]
        %v335 = vld [vmem:[%s1 + $0x24] sm:$0xf]
        %v336 = vld [vmem:[%s1 + $0x28] sm:$0xf]
        %v337 = vld [vmem:[%s1 + $0x2c] sm:$0xf]
        %v338 = vld [vmem:[%s1 + $0x30] sm:$0xf]
        %v339 = vld [vmem:[%s1 + $0x34] sm:$0xf]
        %v340 = vld [vmem:[%s1 + $0x38] sm:$0xf]
        %v341 = vld [vmem:[%s1 + $0x3c] sm:$0xf]
        %v342 = vld [vmem:[%s294] sm:$0xff]
        %v343 = vld [vmem:[%s294 + $0x8] sm:$0xff]
        %v344 = vld [vmem:[%s294 + $0x10] sm:$0x33]
        %v345 = vld [vmem:[%s2] sm:$0xff]
        %v346 = vld [vmem:[%s2 + $0x8] sm:$0xff]
        %v347 = vld [vmem:[%s2 + $0x10] sm:$0xff]
        %v348 = vld [vmem:[%s2 + $0x18] sm:$0xff]
        %v349 = vld [vmem:[%s2 + $0x20] sm:$0xff]
        %v350 = vld [vmem:[%s2 + $0x28] sm:$0xff]
        %v351 = vld [vmem:[%s2 + $0x30] sm:$0xff]
        %v352 = vld [vmem:[%s2 + $0x38] sm:$0xff]
        %v353 = vld [vmem:[%s2 + $0x40] sm:$0xff]
        %v354 = vld [vmem:[%s2 + $0x48] sm:$0xff]
        %v355 = vld [vmem:[%s2 + $0x50] sm:$0xff]
        %v356 = vld [vmem:[%s2 + $0x58] sm:$0xff]
        %v357 = vld [vmem:[%s2 + $0x60] sm:$0xff]
        %v358 = vld [vmem:[%s2 + $0x68] sm:$0xff]
        %v359 = vld [vmem:[%s2 + $0x70] sm:$0xff]
        %v360 = vld [vmem:[%s2 + $0x78] sm:$0xff]
        %362 = vset.pattern.permute.xlu0 0
        %363 = vperm.xlu0 %362, %v345
        %v364 = vpop.permute.xlu0 %363
        %367 = vset.pattern.permute.xlu0 0
        %368 = vperm.xlu0 %367, %v346
        %v369 = vpop.permute.xlu0 %368
        %372 = vset.pattern.permute.xlu0 0
        %373 = vperm.xlu0 %372, %v347
        %v374 = vpop.permute.xlu0 %373
        %377 = vset.pattern.permute.xlu0 0
        %378 = vperm.xlu0 %377, %v348
        %v379 = vpop.permute.xlu0 %378
        %382 = vset.pattern.permute.xlu0 0
        %383 = vperm.xlu0 %382, %v349
        %v384 = vpop.permute.xlu0 %383
        %387 = vset.pattern.permute.xlu0 0
        %388 = vperm.xlu0 %387, %v350
        %v389 = vpop.permute.xlu0 %388
        %392 = vset.pattern.permute.xlu0 0
        %393 = vperm.xlu0 %392, %v351
        %v394 = vpop.permute.xlu0 %393
        %397 = vset.pattern.permute.xlu0 0
        %398 = vperm.xlu0 %397, %v352
        %v399 = vpop.permute.xlu0 %398
        %402 = vset.pattern.permute.xlu0 0
        %403 = vperm.xlu0 %402, %v353
        %v404 = vpop.permute.xlu0 %403
        %407 = vset.pattern.permute.xlu0 0
        %408 = vperm.xlu0 %407, %v354
        %v409 = vpop.permute.xlu0 %408
        %412 = vset.pattern.permute.xlu0 0
        %413 = vperm.xlu0 %412, %v355
        %v414 = vpop.permute.xlu0 %413
        %417 = vset.pattern.permute.xlu0 0
        %418 = vperm.xlu0 %417, %v356
        %v419 = vpop.permute.xlu0 %418
        %422 = vset.pattern.permute.xlu0 0
        %423 = vperm.xlu0 %422, %v357
        %v424 = vpop.permute.xlu0 %423
        %427 = vset.pattern.permute.xlu0 0
        %428 = vperm.xlu0 %427, %v358
        %v429 = vpop.permute.xlu0 %428
        %432 = vset.pattern.permute.xlu0 0
        %433 = vperm.xlu0 %432, %v359
        %v434 = vpop.permute.xlu0 %433
        %437 = vset.pattern.permute.xlu0 0
        %438 = vperm.xlu0 %437, %v360
        %v439 = vpop.permute.xlu0 %438
        %v457 = vunpack.c.l.b16 %v326
        %v458 = vunpack.c.l.b16 %v327
        %v459 = vunpack.c.l.b16 %v328
        %v460 = vunpack.c.l.b16 %v329
        %v461 = vunpack.c.l.b16 %v330
        %v462 = vunpack.c.l.b16 %v331
        %v463 = vunpack.c.l.b16 %v332
        %v464 = vunpack.c.l.b16 %v333
        %v465 = vunpack.c.l.b16 %v334
        %v466 = vunpack.c.l.b16 %v335
        %v467 = vunpack.c.l.b16 %v336
        %v468 = vunpack.c.l.b16 %v337
        %v469 = vunpack.c.l.b16 %v338
        %v470 = vunpack.c.l.b16 %v339
        %v471 = vunpack.c.l.b16 %v340
        %v472 = vunpack.c.l.b16 %v341
        %v473 = vpack.c.b16 %v458, %v457
        %v474 = vpack.c.b16 %v460, %v459
        %v475 = vpack.c.b16 %v462, %v461
        %v476 = vpack.c.b16 %v464, %v463
        %v477 = vpack.c.b16 %v466, %v465
        %v478 = vpack.c.b16 %v468, %v467
        %v479 = vpack.c.b16 %v470, %v469
        %v480 = vpack.c.b16 %v472, %v471
        %v484 = vunpack.c.l.b16 %v342
        %v485 = vunpack.c.h.b16 %v342
        %v486 = vunpack.c.l.b16 %v343
        %v487 = vunpack.c.h.b16 %v343
        %v488 = vunpack.c.l.b16 %v344
        %v489 = vunpack.c.h.b16 %v344
        %v490 = vpack.c.b16 %v486, %v484
        %v491 = vpack.c.b16 %v487, %v485
        %v492 = vpack.c.b16 %v488, %v488
        %v493 = vpack.c.b16 %v489, %v489
        %vm496 = vcmask 162816
        %v498 = vsel %vm496, %v473, 0
        %v501 = vsel %vm496, %v474, 0
        %v504 = vsel %vm496, %v475, 0
        %v507 = vsel %vm496, %v476, 0
        %v510 = vsel %vm496, %v477, 0
        %v513 = vsel %vm496, %v478, 0
        %v516 = vsel %vm496, %v479, 0
        %v519 = vsel %vm496, %v480, 0
        %vm521 = vcmask 1041408
        %v523 = vsel %vm521, %v492, 0
        %v526 = vsel %vm521, %v493, 0
        %528 = vmatprep.subr.bf16.mxu0 0
        %529 = vmatpush1.bf16.msra.mxu0 0
        %530 = vmatprep.subr.bf16.mxu0 0
        %531 = vmatpush1.bf16.msra.mxu0 0
        %532 = vmatprep.subr.bf16.mxu0 0
        %533 = vmatpush1.bf16.msra.mxu0 0
        %534 = vmatprep.subr.bf16.mxu0 0
        %535 = vmatpush1.bf16.msra.mxu0 0
        %536 = vmatprep.subr.bf16.mxu0 0
        %537 = vmatpush1.bf16.msra.mxu0 0
        %538 = vmatprep.subr.bf16.mxu0 0
        %539 = vmatpush1.bf16.msra.mxu0 0
        %540 = vmatprep.subr.bf16.mxu0 %v526
        %541 = vmatpush1.bf16.msra.mxu0 %v523
        %542 = vmatprep.subr.bf16.mxu0 %v491
        %543 = vmatpush1.bf16.msra.mxu0 %v490
        %544 = vmatprep.subr.bf16.mxu0 0
        %545 = vmatpush2.bf16.msra.mxu0 0
        %546 = vmatprep.subr.bf16.mxu0 0
        %547 = vmatpush2.bf16.msra.mxu0 0
        %548 = vmatprep.subr.bf16.mxu0 0
        %549 = vmatpush2.bf16.msra.mxu0 0
        %550 = vmatprep.subr.bf16.mxu0 0
        %551 = vmatpush2.bf16.msra.mxu0 0
        %552 = vmatprep.subr.bf16.mxu0 0
        %553 = vmatpush2.bf16.msra.mxu0 0
        %554 = vmatprep.subr.bf16.mxu0 0
        %555 = vmatpush2.bf16.msra.mxu0 0
        %556 = vmatprep.subr.bf16.mxu0 0
        %557 = vmatpush2.bf16.msra.mxu0 0
        %558 = vmatprep.subr.bf16.mxu0 0
        %559 = vmatpush2.bf16.msra.mxu0 0
        %560 = vmatprep.mubr.bf16.mxu0 0
        %561 = vmatmul.mubr.bf16.gmra.mxu0 %v498
        %v562 = vpop.f32.mrf.mxu0
        %v563 = vadd.f32 %v364, %v562
        %v564 = vpop.f32.mrf.mxu0
        %v565 = vadd.f32 %v364, %v564
        %v566 = vpop.f32.mrf.mxu0
        %v567 = vadd.f32 %v369, %v566
        %v568 = vpop.f32.mrf.mxu0
        %v569 = vadd.f32 %v369, %v568
        %570 = vmatprep.mubr.bf16.mxu0 0
        %571 = vmatmul.mubr.bf16.gmra.mxu0 %v501
        %v572 = vpop.f32.mrf.mxu0
        %v573 = vadd.f32 %v374, %v572
        %v574 = vpop.f32.mrf.mxu0
        %v575 = vadd.f32 %v374, %v574
        %v576 = vpop.f32.mrf.mxu0
        %v577 = vadd.f32 %v379, %v576
        %v578 = vpop.f32.mrf.mxu0
        %v579 = vadd.f32 %v379, %v578
        %580 = vmatprep.mubr.bf16.mxu0 0
        %581 = vmatmul.mubr.bf16.gmra.mxu0 %v504
        %v582 = vpop.f32.mrf.mxu0
        %v583 = vadd.f32 %v384, %v582
        %v584 = vpop.f32.mrf.mxu0
        %v585 = vadd.f32 %v384, %v584
        %v586 = vpop.f32.mrf.mxu0
        %v587 = vadd.f32 %v389, %v586
        %v588 = vpop.f32.mrf.mxu0
        %v589 = vadd.f32 %v389, %v588
        %590 = vmatprep.mubr.bf16.mxu0 0
        %591 = vmatmul.mubr.bf16.gmra.mxu0 %v507
        %v592 = vpop.f32.mrf.mxu0
        %v593 = vadd.f32 %v394, %v592
        %v594 = vpop.f32.mrf.mxu0
        %v595 = vadd.f32 %v394, %v594
        %v596 = vpop.f32.mrf.mxu0
        %v597 = vadd.f32 %v399, %v596
        %v598 = vpop.f32.mrf.mxu0
        %v599 = vadd.f32 %v399, %v598
        %600 = vmatprep.mubr.bf16.mxu0 0
        %601 = vmatmul.mubr.bf16.gmra.mxu0 %v510
        %v602 = vpop.f32.mrf.mxu0
        %v603 = vadd.f32 %v404, %v602
        %v604 = vpop.f32.mrf.mxu0
        %v605 = vadd.f32 %v404, %v604
        %v606 = vpop.f32.mrf.mxu0
        %v607 = vadd.f32 %v409, %v606
        %v608 = vpop.f32.mrf.mxu0
        %v609 = vadd.f32 %v409, %v608
        %610 = vmatprep.mubr.bf16.mxu0 0
        %611 = vmatmul.mubr.bf16.gmra.mxu0 %v513
        %v612 = vpop.f32.mrf.mxu0
        %v613 = vadd.f32 %v414, %v612
        %v614 = vpop.f32.mrf.mxu0
        %v615 = vadd.f32 %v414, %v614
        %v616 = vpop.f32.mrf.mxu0
        %v617 = vadd.f32 %v419, %v616
        %v618 = vpop.f32.mrf.mxu0
        %v619 = vadd.f32 %v419, %v618
        %620 = vmatprep.mubr.bf16.mxu0 0
        %621 = vmatmul.mubr.bf16.gmra.mxu0 %v516
        %v622 = vpop.f32.mrf.mxu0
        %v623 = vadd.f32 %v424, %v622
        %v624 = vpop.f32.mrf.mxu0
        %v625 = vadd.f32 %v424, %v624
        %v626 = vpop.f32.mrf.mxu0
        %v627 = vadd.f32 %v429, %v626
        %v628 = vpop.f32.mrf.mxu0
        %v629 = vadd.f32 %v429, %v628
        %630 = vmatprep.mubr.bf16.mxu0 0
        %631 = vmatmul.mubr.bf16.gmra.mxu0 %v519
        %v632 = vpop.f32.mrf.mxu0
        %v633 = vadd.f32 %v434, %v632
        %v634 = vpop.f32.mrf.mxu0
        %v635 = vadd.f32 %v434, %v634
        %v636 = vpop.f32.mrf.mxu0
        %v637 = vadd.f32 %v439, %v636
        %v638 = vpop.f32.mrf.mxu0
        %v639 = vadd.f32 %v439, %v638
        %640 = vdwg.mxu0
        %v641 = vmax.f32 %v563, 0.0
        %v642 = vmax.f32 %v565, 0.0
        %v643 = vmax.f32 %v567, 0.0
        %v644 = vmax.f32 %v569, 0.0
        %v645 = vmax.f32 %v573, 0.0
        %v646 = vmax.f32 %v575, 0.0
        %v647 = vmax.f32 %v577, 0.0
        %v648 = vmax.f32 %v579, 0.0
        %v649 = vmax.f32 %v583, 0.0
        %v650 = vmax.f32 %v585, 0.0
        %v651 = vmax.f32 %v587, 0.0
        %v652 = vmax.f32 %v589, 0.0
        %v653 = vmax.f32 %v593, 0.0
        %v654 = vmax.f32 %v595, 0.0
        %v655 = vmax.f32 %v597, 0.0
        %v656 = vmax.f32 %v599, 0.0
        %v657 = vmax.f32 %v603, 0.0
        %v658 = vmax.f32 %v605, 0.0
        %v659 = vmax.f32 %v607, 0.0
        %v660 = vmax.f32 %v609, 0.0
        %v661 = vmax.f32 %v613, 0.0
        %v662 = vmax.f32 %v615, 0.0
        %v663 = vmax.f32 %v617, 0.0
        %v664 = vmax.f32 %v619, 0.0
        %v665 = vmax.f32 %v623, 0.0
        %v666 = vmax.f32 %v625, 0.0
        %v667 = vmax.f32 %v627, 0.0
        %v668 = vmax.f32 %v629, 0.0
        %v669 = vmax.f32 %v633, 0.0
        %v670 = vmax.f32 %v635, 0.0
        %v671 = vmax.f32 %v637, 0.0
        %v672 = vmax.f32 %v639, 0.0
        %v673 = vld [vmem:[%s3] sm:$0xf]
        %v674 = vld [vmem:[%s3 + $0x4] sm:$0xf]
        %v675 = vld [vmem:[%s3 + $0x8] sm:$0xf]
        %v676 = vld [vmem:[%s3 + $0xc] sm:$0xf]
        %v677 = vld [vmem:[%s3 + $0x10] sm:$0xf]
        %v678 = vld [vmem:[%s3 + $0x14] sm:$0xf]
        %v679 = vld [vmem:[%s3 + $0x18] sm:$0xf]
        %v680 = vld [vmem:[%s3 + $0x1c] sm:$0xf]
        %v681 = vld [vmem:[%s3 + $0x20] sm:$0xf]
        %v682 = vld [vmem:[%s3 + $0x24] sm:$0xf]
        %v683 = vld [vmem:[%s3 + $0x28] sm:$0xf]
        %v684 = vld [vmem:[%s3 + $0x2c] sm:$0xf]
        %v685 = vld [vmem:[%s3 + $0x30] sm:$0xf]
        %v686 = vld [vmem:[%s3 + $0x34] sm:$0xf]
        %v687 = vld [vmem:[%s3 + $0x38] sm:$0xf]
        %v688 = vld [vmem:[%s3 + $0x3c] sm:$0xf]
        %v689 = vpack.c.bf16 %v643, %v641
        %v690 = vpack.c.bf16 %v644, %v642
        %v691 = vpack.c.bf16 %v647, %v645
        %v692 = vpack.c.bf16 %v648, %v646
        %v693 = vpack.c.bf16 %v651, %v649
        %v694 = vpack.c.bf16 %v652, %v650
        %v695 = vpack.c.bf16 %v655, %v653
        %v696 = vpack.c.bf16 %v656, %v654
        %v697 = vpack.c.bf16 %v659, %v657
        %v698 = vpack.c.bf16 %v660, %v658
        %v699 = vpack.c.bf16 %v663, %v661
        %v700 = vpack.c.bf16 %v664, %v662
        %v701 = vpack.c.bf16 %v667, %v665
        %v702 = vpack.c.bf16 %v668, %v666
        %v703 = vpack.c.bf16 %v671, %v669
        %v704 = vpack.c.bf16 %v672, %v670
        %v705 = vld [vmem:[%s4] sm:$0xff]
        %v706 = vld [vmem:[%s4 + $0x8] sm:$0xff]
        %v707 = vld [vmem:[%s4 + $0x10] sm:$0xff]
        %v708 = vld [vmem:[%s4 + $0x18] sm:$0xff]
        %v709 = vld [vmem:[%s4 + $0x20] sm:$0xff]
        %v710 = vld [vmem:[%s4 + $0x28] sm:$0xff]
        %v711 = vld [vmem:[%s4 + $0x30] sm:$0xff]
        %v712 = vld [vmem:[%s4 + $0x38] sm:$0xff]
        %v713 = vld [vmem:[%s4 + $0x40] sm:$0xff]
        %v714 = vld [vmem:[%s4 + $0x48] sm:$0xff]
        %v715 = vld [vmem:[%s4 + $0x50] sm:$0xff]
        %v716 = vld [vmem:[%s4 + $0x58] sm:$0xff]
        %v717 = vld [vmem:[%s4 + $0x60] sm:$0xff]
        %v718 = vld [vmem:[%s4 + $0x68] sm:$0xff]
        %v719 = vld [vmem:[%s4 + $0x70] sm:$0xff]
        %v720 = vld [vmem:[%s4 + $0x78] sm:$0xff]
        %722 = vset.pattern.permute.xlu0 0
        %723 = vperm.xlu0 %722, %v705
        %v724 = vpop.permute.xlu0 %723
        %727 = vset.pattern.permute.xlu0 0
        %728 = vperm.xlu0 %727, %v706
        %v729 = vpop.permute.xlu0 %728
        %732 = vset.pattern.permute.xlu0 0
        %733 = vperm.xlu0 %732, %v707
        %v734 = vpop.permute.xlu0 %733
        %737 = vset.pattern.permute.xlu0 0
        %738 = vperm.xlu0 %737, %v708
        %v739 = vpop.permute.xlu0 %738
        %742 = vset.pattern.permute.xlu0 0
        %743 = vperm.xlu0 %742, %v709
        %v744 = vpop.permute.xlu0 %743
        %747 = vset.pattern.permute.xlu0 0
        %748 = vperm.xlu0 %747, %v710
        %v749 = vpop.permute.xlu0 %748
        %752 = vset.pattern.permute.xlu0 0
        %753 = vperm.xlu0 %752, %v711
        %v754 = vpop.permute.xlu0 %753
        %757 = vset.pattern.permute.xlu0 0
        %758 = vperm.xlu0 %757, %v712
        %v759 = vpop.permute.xlu0 %758
        %762 = vset.pattern.permute.xlu0 0
        %763 = vperm.xlu0 %762, %v713
        %v764 = vpop.permute.xlu0 %763
        %767 = vset.pattern.permute.xlu0 0
        %768 = vperm.xlu0 %767, %v714
        %v769 = vpop.permute.xlu0 %768
        %772 = vset.pattern.permute.xlu0 0
        %773 = vperm.xlu0 %772, %v715
        %v774 = vpop.permute.xlu0 %773
        %777 = vset.pattern.permute.xlu0 0
        %778 = vperm.xlu0 %777, %v716
        %v779 = vpop.permute.xlu0 %778
        %782 = vset.pattern.permute.xlu0 0
        %783 = vperm.xlu0 %782, %v717
        %v784 = vpop.permute.xlu0 %783
        %787 = vset.pattern.permute.xlu0 0
        %788 = vperm.xlu0 %787, %v718
        %v789 = vpop.permute.xlu0 %788
        %792 = vset.pattern.permute.xlu0 0
        %793 = vperm.xlu0 %792, %v719
        %v794 = vpop.permute.xlu0 %793
        %797 = vset.pattern.permute.xlu0 0
        %798 = vperm.xlu0 %797, %v720
        %v799 = vpop.permute.xlu0 %798
        %v817 = vunpack.c.l.b16 %v673
        %v818 = vunpack.c.l.b16 %v674
        %v819 = vunpack.c.l.b16 %v675
        %v820 = vunpack.c.l.b16 %v676
        %v821 = vunpack.c.l.b16 %v677
        %v822 = vunpack.c.l.b16 %v678
        %v823 = vunpack.c.l.b16 %v679
        %v824 = vunpack.c.l.b16 %v680
        %v825 = vunpack.c.l.b16 %v681
        %v826 = vunpack.c.l.b16 %v682
        %v827 = vunpack.c.l.b16 %v683
        %v828 = vunpack.c.l.b16 %v684
        %v829 = vunpack.c.l.b16 %v685
        %v830 = vunpack.c.l.b16 %v686
        %v831 = vunpack.c.l.b16 %v687
        %v832 = vunpack.c.l.b16 %v688
        %v833 = vpack.c.b16 %v818, %v817
        %v834 = vpack.c.b16 %v820, %v819
        %v835 = vpack.c.b16 %v822, %v821
        %v836 = vpack.c.b16 %v824, %v823
        %v837 = vpack.c.b16 %v826, %v825
        %v838 = vpack.c.b16 %v828, %v827
        %v839 = vpack.c.b16 %v830, %v829
        %v840 = vpack.c.b16 %v832, %v831
        %849 = vmatprep.subr.bf16.mxu0 %v704
        %850 = vmatpush1.bf16.msra.mxu0 %v703
        %851 = vmatprep.subr.bf16.mxu0 %v702
        %852 = vmatpush1.bf16.msra.mxu0 %v701
        %853 = vmatprep.subr.bf16.mxu0 %v700
        %854 = vmatpush1.bf16.msra.mxu0 %v699
        %855 = vmatprep.subr.bf16.mxu0 %v698
        %856 = vmatpush1.bf16.msra.mxu0 %v697
        %857 = vmatprep.subr.bf16.mxu0 %v696
        %858 = vmatpush1.bf16.msra.mxu0 %v695
        %859 = vmatprep.subr.bf16.mxu0 %v694
        %860 = vmatpush1.bf16.msra.mxu0 %v693
        %861 = vmatprep.subr.bf16.mxu0 %v692
        %862 = vmatpush1.bf16.msra.mxu0 %v691
        %863 = vmatprep.subr.bf16.mxu0 %v690
        %864 = vmatpush1.bf16.msra.mxu0 %v689
        %865 = vmatprep.subr.bf16.mxu0 0
        %866 = vmatpush2.bf16.msra.mxu0 0
        %867 = vmatprep.subr.bf16.mxu0 0
        %868 = vmatpush2.bf16.msra.mxu0 0
        %869 = vmatprep.subr.bf16.mxu0 0
        %870 = vmatpush2.bf16.msra.mxu0 0
        %871 = vmatprep.subr.bf16.mxu0 0
        %872 = vmatpush2.bf16.msra.mxu0 0
        %873 = vmatprep.subr.bf16.mxu0 0
        %874 = vmatpush2.bf16.msra.mxu0 0
        %875 = vmatprep.subr.bf16.mxu0 0
        %876 = vmatpush2.bf16.msra.mxu0 0
        %877 = vmatprep.subr.bf16.mxu0 0
        %878 = vmatpush2.bf16.msra.mxu0 0
        %879 = vmatprep.subr.bf16.mxu0 0
        %880 = vmatpush2.bf16.msra.mxu0 0
        %881 = vmatprep.mubr.bf16.mxu0 0
        %882 = vmatmul.mubr.bf16.gmra.mxu0 %v833
        %v883 = vpop.f32.mrf.mxu0
        %v884 = vadd.f32 %v724, %v883
        %v885 = vpop.f32.mrf.mxu0
        %v886 = vadd.f32 %v724, %v885
        %v887 = vpop.f32.mrf.mxu0
        %v888 = vadd.f32 %v729, %v887
        %v889 = vpop.f32.mrf.mxu0
        %v890 = vadd.f32 %v729, %v889
        %891 = vmatprep.mubr.bf16.mxu0 0
        %892 = vmatmul.mubr.bf16.gmra.mxu0 %v834
        %v893 = vpop.f32.mrf.mxu0
        %v894 = vadd.f32 %v734, %v893
        %v895 = vpop.f32.mrf.mxu0
        %v896 = vadd.f32 %v734, %v895
        %v897 = vpop.f32.mrf.mxu0
        %v898 = vadd.f32 %v739, %v897
        %v899 = vpop.f32.mrf.mxu0
        %v900 = vadd.f32 %v739, %v899
        %901 = vmatprep.mubr.bf16.mxu0 0
        %902 = vmatmul.mubr.bf16.gmra.mxu0 %v835
        %v903 = vpop.f32.mrf.mxu0
        %v904 = vadd.f32 %v744, %v903
        %v905 = vpop.f32.mrf.mxu0
        %v906 = vadd.f32 %v744, %v905
        %v907 = vpop.f32.mrf.mxu0
        %v908 = vadd.f32 %v749, %v907
        %v909 = vpop.f32.mrf.mxu0
        %v910 = vadd.f32 %v749, %v909
        %911 = vmatprep.mubr.bf16.mxu0 0
        %912 = vmatmul.mubr.bf16.gmra.mxu0 %v836
        %v913 = vpop.f32.mrf.mxu0
        %v914 = vadd.f32 %v754, %v913
        %v915 = vpop.f32.mrf.mxu0
        %v916 = vadd.f32 %v754, %v915
        %v917 = vpop.f32.mrf.mxu0
        %v918 = vadd.f32 %v759, %v917
        %v919 = vpop.f32.mrf.mxu0
        %v920 = vadd.f32 %v759, %v919
        %921 = vmatprep.mubr.bf16.mxu0 0
        %922 = vmatmul.mubr.bf16.gmra.mxu0 %v837
        %v923 = vpop.f32.mrf.mxu0
        %v924 = vadd.f32 %v764, %v923
        %v925 = vpop.f32.mrf.mxu0
        %v926 = vadd.f32 %v764, %v925
        %v927 = vpop.f32.mrf.mxu0
        %v928 = vadd.f32 %v769, %v927
        %v929 = vpop.f32.mrf.mxu0
        %v930 = vadd.f32 %v769, %v929
        %931 = vmatprep.mubr.bf16.mxu0 0
        %932 = vmatmul.mubr.bf16.gmra.mxu0 %v838
        %v933 = vpop.f32.mrf.mxu0
        %v934 = vadd.f32 %v774, %v933
        %v935 = vpop.f32.mrf.mxu0
        %v936 = vadd.f32 %v774, %v935
        %v937 = vpop.f32.mrf.mxu0
        %v938 = vadd.f32 %v779, %v937
        %v939 = vpop.f32.mrf.mxu0
        %v940 = vadd.f32 %v779, %v939
        %941 = vmatprep.mubr.bf16.mxu0 0
        %942 = vmatmul.mubr.bf16.gmra.mxu0 %v839
        %v943 = vpop.f32.mrf.mxu0
        %v944 = vadd.f32 %v784, %v943
        %v945 = vpop.f32.mrf.mxu0
        %v946 = vadd.f32 %v784, %v945
        %v947 = vpop.f32.mrf.mxu0
        %v948 = vadd.f32 %v789, %v947
        %v949 = vpop.f32.mrf.mxu0
        %v950 = vadd.f32 %v789, %v949
        %951 = vmatprep.mubr.bf16.mxu0 0
        %952 = vmatmul.mubr.bf16.gmra.mxu0 %v840
        %v953 = vpop.f32.mrf.mxu0
        %v954 = vadd.f32 %v794, %v953
        %v955 = vpop.f32.mrf.mxu0
        %v956 = vadd.f32 %v794, %v955
        %v957 = vpop.f32.mrf.mxu0
        %v958 = vadd.f32 %v799, %v957
        %v959 = vpop.f32.mrf.mxu0
        %v960 = vadd.f32 %v799, %v959
        %961 = vdwg.mxu0
        %v962 = vmax.f32 %v884, 0.0
        %v963 = vmax.f32 %v886, 0.0
        %v964 = vmax.f32 %v888, 0.0
        %v965 = vmax.f32 %v890, 0.0
        %v966 = vmax.f32 %v894, 0.0
        %v967 = vmax.f32 %v896, 0.0
        %v968 = vmax.f32 %v898, 0.0
        %v969 = vmax.f32 %v900, 0.0
        %v970 = vmax.f32 %v904, 0.0
        %v971 = vmax.f32 %v906, 0.0
        %v972 = vmax.f32 %v908, 0.0
        %v973 = vmax.f32 %v910, 0.0
        %v974 = vmax.f32 %v914, 0.0
        %v975 = vmax.f32 %v916, 0.0
        %v976 = vmax.f32 %v918, 0.0
        %v977 = vmax.f32 %v920, 0.0
        %v978 = vmax.f32 %v924, 0.0
        %v979 = vmax.f32 %v926, 0.0
        %v980 = vmax.f32 %v928, 0.0
        %v981 = vmax.f32 %v930, 0.0
        %v982 = vmax.f32 %v934, 0.0
        %v983 = vmax.f32 %v936, 0.0
        %v984 = vmax.f32 %v938, 0.0
        %v985 = vmax.f32 %v940, 0.0
        %v986 = vmax.f32 %v944, 0.0
        %v987 = vmax.f32 %v946, 0.0
        %v988 = vmax.f32 %v948, 0.0
        %v989 = vmax.f32 %v950, 0.0
        %v990 = vmax.f32 %v954, 0.0
        %v991 = vmax.f32 %v956, 0.0
        %v992 = vmax.f32 %v958, 0.0
        %v993 = vmax.f32 %v960, 0.0
        %v994 = vld [vmem:[%s5] sm:$0x1]
        %v995 = vpack.c.bf16 %v964, %v962
        %v996 = vpack.c.bf16 %v965, %v963
        %v997 = vpack.c.bf16 %v968, %v966
        %v998 = vpack.c.bf16 %v969, %v967
        %v999 = vpack.c.bf16 %v972, %v970
        %v1000 = vpack.c.bf16 %v973, %v971
        %v1001 = vpack.c.bf16 %v976, %v974
        %v1002 = vpack.c.bf16 %v977, %v975
        %v1003 = vpack.c.bf16 %v980, %v978
        %v1004 = vpack.c.bf16 %v981, %v979
        %v1005 = vpack.c.bf16 %v984, %v982
        %v1006 = vpack.c.bf16 %v985, %v983
        %v1007 = vpack.c.bf16 %v988, %v986
        %v1008 = vpack.c.bf16 %v989, %v987
        %v1009 = vpack.c.bf16 %v992, %v990
        %v1010 = vpack.c.bf16 %v993, %v991
        %v1011 = vld [vmem:[#allocation2] sm:$0x1]
        %1013 = vset.pattern.permute.xlu0 0
        %1014 = vperm.xlu0 %1013, %v1011
        %v1015 = vpop.permute.xlu0 %1014
        %v1017 = vlaneseq
        %v1018 = vshrl.u32 %v1017, 7
        %v1019 = vsub.s32 0, %v1018
        %v1020 = vrot.slane %v1015, %v1019
        %1021 = vmatprep.subr.bf16.mxu0 %v1010
        %1022 = vmatpush1.bf16.msra.mxu0 %v1009
        %1023 = vmatprep.subr.bf16.mxu0 %v1008
        %1024 = vmatpush1.bf16.msra.mxu0 %v1007
        %1025 = vmatprep.subr.bf16.mxu0 %v1006
        %1026 = vmatpush1.bf16.msra.mxu0 %v1005
        %1027 = vmatprep.subr.bf16.mxu0 %v1004
        %1028 = vmatpush1.bf16.msra.mxu0 %v1003
        %1029 = vmatprep.subr.bf16.mxu0 %v1002
        %1030 = vmatpush1.bf16.msra.mxu0 %v1001
        %1031 = vmatprep.subr.bf16.mxu0 %v1000
        %1032 = vmatpush1.bf16.msra.mxu0 %v999
        %1033 = vmatprep.subr.bf16.mxu0 %v998
        %1034 = vmatpush1.bf16.msra.mxu0 %v997
        %1035 = vmatprep.subr.bf16.mxu0 %v996
        %1036 = vmatpush1.bf16.msra.mxu0 %v995
        %1037 = vmatprep.subr.bf16.mxu0 0
        %1038 = vmatpush2.bf16.msra.mxu0 0
        %1039 = vmatprep.subr.bf16.mxu0 0
        %1040 = vmatpush2.bf16.msra.mxu0 0
        %1041 = vmatprep.subr.bf16.mxu0 0
        %1042 = vmatpush2.bf16.msra.mxu0 0
        %1043 = vmatprep.subr.bf16.mxu0 0
        %1044 = vmatpush2.bf16.msra.mxu0 0
        %1045 = vmatprep.subr.bf16.mxu0 0
        %1046 = vmatpush2.bf16.msra.mxu0 0
        %1047 = vmatprep.subr.bf16.mxu0 0
        %1048 = vmatpush2.bf16.msra.mxu0 0
        %1049 = vmatprep.subr.bf16.mxu0 0
        %1050 = vmatpush2.bf16.msra.mxu0 0
        %1051 = vmatprep.subr.bf16.mxu0 0
        %1052 = vmatpush2.bf16.msra.mxu0 0
        %1053 = vmatprep.mubr.bf16.mxu0 0
        %1054 = vmatmul.mubr.bf16.gmra.mxu0 %v994
        %v1055 = vpop.f32.mrf.mxu0
        %v1056 = vadd.f32 %v1020, %v1055
        %v1057 = vpop.f32.mrf.mxu0
        %v1058 = vadd.f32 %v1020, %v1057
        %v1059 = vpop.f32.mrf.mxu0
        %v1060 = vpop.f32.mrf.mxu0
        %1061 = vdwg.mxu0
        %v1064 = vcombine.low %v1056, %v1058
        %v1066 = vunpack.c.l.s4 1966171168
        %v1067 = vunpack.c.0.s8 %v1066
        %v1068 = vlaneseq
        %v1069 = vshrl.u32 %v1068, 7
        %v1070 = vsub.s32 %v1067, %v1069
        %v1071 = vrot.slane %v1064, %v1070
        %v1073 = vunpack.c.l.s4 1966171168
        %v1074 = vunpack.c.0.s8 %v1073
        %v1075 = vlaneseq
        %v1076 = vshrl.u32 %v1075, 7
        %v1077 = vsub.s32 %v1074, %v1076
        %v1078 = vrot.slane %v1071, %v1077
        %v1080 = vlaneseq
        %vm1081 = vcmp.ge.s32.totalorder %v1080, 0
        %vm1082 = vcmp.lt.s32.totalorder %v1080, 256
        %vm1083 = vmand %vm1081, %vm1082
        %1084 = vst.msk [vmem:[%s322] sm:$0x3] %vm1083, %v1078
        %s1085 = sand.u32 %s183, 1
        %s1086 = scalar_lea.sflag [#allocation5], %s1085
        %s1087 = sand.u32 %s183, 1
        %s1088 = smul.addr %s1087, 2
        %s1089 = scalar_lea.vmem [#allocation4], %s1088
        // Predicated region
        $region87: #{tpu_custom_call.1} parent=81 // pred_check
          %p1090 = pneg %p193
        $region88: #{tpu_custom_call.1} parent=81 // pred_check_branch
          %1092 = sbr.rel (%p1090) target = $region90
        $region89: #{tpu_custom_call.1} parent=81 // pred_region
          %s1093 = smul.u32 2, %s23
          %s1095 = ssub.s32 32, 32
          %1096 = vsyncadd %s1086, %s1095
          %s1097 = smul.addr %s1093, 16
          %s1098 = scalar_lea.hbm %s7, %s1097
          %s1100 = sshll.u32 %s1089, 4
          %s1101 = int_to_ptr.vmem [resolvable:$true] %s1100
          %1103 = dma.vmem_to_hbm [thread:$0]  %s1101, 32, %s1098, %s1086
        $region90: #{tpu_custom_call.1} parent=81 // pred_fallthru
          _
      $region82: #{tpu_custom_call.1} parent=5 // pred_fallthru
        _
      %p1104 = scmp.le.s32.totalorder 2, %s18
      // Predicated region
      $region91: #{tpu_custom_call.1} parent=5 // pred_check
        %p1105 = pneg %p1104
      $region92: #{tpu_custom_call.1} parent=5 // pred_check_branch
        %1107 = sbr.rel (%p1105) target = $region94
      $region93: #{tpu_custom_call.1} parent=5 // pred_region
        %s1108 = ssub.s32 %s18, 2
        // Predicated region
        $region95: #{tpu_custom_call.1} parent=93 // pred_check
          %p1109 = pneg %p199
        $region96: #{tpu_custom_call.1} parent=93 // pred_check_branch
          %1111 = sbr.rel (%p1109) target = $region98
        $region97: #{tpu_custom_call.1} parent=93 // pred_region
          %s1112 = sand.u32 %s184, 1
          %s1113 = scalar_lea.sflag [#allocation5], %s1112
          %s1114 = sand.u32 %s184, 1
          %s1115 = smul.addr %s1114, 2
          %s1116 = scalar_lea.vmem [#allocation4], %s1115
          %1117 = dma.done %s1113, 32
        $region98: #{tpu_custom_call.1} parent=93 // pred_fallthru
          _
      $region94: #{tpu_custom_call.1} parent=5 // pred_fallthru
        _
    $region6: #{tpu_custom_call.1} parent=1 // loop_footer
      %s22 = sadd.s32 1, %s18
    $region7: #{tpu_custom_call.1} parent=1 // loop_footer_branch
      %17 = sbr.rel target = $region3
    $region8: #{tpu_custom_call.1} parent=1 // loop_exit
      _
    %1118 = vsyncpa [#allocation5], 1
    %s1119 = scalar_lea.sflag [#allocation5], 1
    %1120 = vsyncpa %s1119, 1

</llo_original>
